<compile_context>
chip_gen: v5e
topology: v5e:2x2
jax: 0.10.0
libtpu: 0.0.40
codegen_flags: <defaults>
</compile_context>

<pallas_src>
import functools

import jax
import jax.numpy as jnp
from jax import lax
from jax.experimental import pallas as pl
from jax.experimental.pallas import tpu as pltpu


# Acceptance probability per Marsaglia-Tsang round is > 0.95 for alpha+1 in (1, 2),
# so P(all rounds reject) < 2e-8 per element; the fallback (sample = d) is a
# negligible, documented bias.
_N_ROUNDS = 6


def _beta_kernel(logits_ref, norm_ref, logu_ref, z_ref, conc_ref):
    logits = logits_ref[...].astype(jnp.float32)            # (TB, 2F)
    conc = jax.nn.sigmoid(logits)                            # (TB, 2F) in (0, 1)
    conc_ref[...] = conc.astype(conc_ref.dtype)              # lane-dense output

    # Clamp for numerical stability of the log(U)/alpha boost.
    alpha = jnp.maximum(conc, 1e-4)

    # Marsaglia-Tsang for Gamma(alpha + 1):  d = (alpha+1) - 1/3, c = 1/sqrt(9d).
    d = alpha + (1.0 - 1.0 / 3.0)
    c = lax.rsqrt(9.0 * d)                                    # single EUP rsqrt

    accepted = jnp.zeros(alpha.shape, dtype=jnp.bool_)
    sample = d                                                # fallback (prob < 2e-8)
    for r in range(_N_ROUNDS):
        x = norm_ref[r]                                       # (TB, 2F) std normal
        t = 1.0 + c * x
        v = t * t * t                                         # explicit cube -> pure VPU muls
        log_u = logu_ref[r]                                   # log(U), precomputed outside
        log_v = jnp.log(jnp.maximum(v, 1e-30))
        ok = (v > 0.0) & (log_u < 0.5 * x * x + d - d * v + d * log_v)
        newly = ok & jnp.logical_not(accepted)
        sample = jnp.where(newly, d * v, sample)
        accepted = accepted | ok

    # Boost Gamma(alpha+1) -> Gamma(alpha) in log space: log G = log(sample) + log(U)/alpha.
    log_gamma = jnp.log(sample) + logu_ref[_N_ROUNDS] / alpha  # (TB, 2F)

    half = log_gamma.shape[-1] // 2
    log_ga = log_gamma[:, :half]
    log_gb = log_gamma[:, half:]
    # Beta(a, b) = Ga / (Ga + Gb) = sigmoid(log Ga - log Gb)   (robust, no underflow)
    z = jax.nn.sigmoid(log_ga - log_gb)
    z_ref[...] = jnp.clip(z, 1e-6, 1.0 - 1e-6).astype(z_ref.dtype)


@functools.partial(jax.jit, static_argnames=("training", "block_rows"))
def beta_forward(logits, key, training=True, block_rows=512):
    """Pallas implementation of Beta.forward for 2-D logits (B, continuous_size)."""
    del training  # rsample (train) vs sample (eval): identical forward numerics.
    B, two_f = logits.shape
    if two_f % 2 != 0:
        raise ValueError("feature dimension must be divisible by 2")
    F = two_f // 2

    # Raw noise generated outside the kernel (see header note).
    kn, ku = jax.random.split(key)
    normals = jax.random.normal(kn, (_N_ROUNDS, B, two_f), dtype=jnp.float32)
    u = jax.random.uniform(ku, (_N_ROUNDS + 1, B, two_f), dtype=jnp.float32,
                           minval=1e-7, maxval=1.0)
    log_u = jnp.log(u)                                        # fused into the RNG by XLA

    # Batch tiling: feature axis always full-width (lane dense); batch tile is either
    # the whole batch (small B) or a multiple of 8 rows.
    if B <= block_rows:
        tb = B
    else:
        tb = max(8, (block_rows // 8) * 8)
    grid = (pl.cdiv(B, tb),)

    n_elem = B * two_f
    cost = pl.CostEstimate(
        flops=int(n_elem * (18 * _N_ROUNDS + 40)),
        transcendentals=int(n_elem * (_N_ROUNDS + 5)),
        bytes_accessed=int(4 * n_elem * (2 * _N_ROUNDS + 2) + 4 * n_elem + 4 * B * F),
    )

    z, conc = pl.pallas_call(
        _beta_kernel,
        out_shape=(
            jax.ShapeDtypeStruct((B, F), jnp.float32),        # z
            jax.ShapeDtypeStruct((B, two_f), jnp.float32),    # conc = sigmoid(logits)
        ),
        grid=grid,
        in_specs=[
            pl.BlockSpec((tb, two_f), lambda i: (i, 0)),                 # logits
            pl.BlockSpec((_N_ROUNDS, tb, two_f), lambda i: (0, i, 0)),   # normals
            pl.BlockSpec((_N_ROUNDS + 1, tb, two_f), lambda i: (0, i, 0)),  # log-uniforms
        ],
        out_specs=(
            pl.BlockSpec((tb, F), lambda i: (i, 0)),
            pl.BlockSpec((tb, two_f), lambda i: (i, 0)),
        ),
        compiler_params=pltpu.CompilerParams(
            dimension_semantics=("parallel",)),
        cost_estimate=cost,
    )(logits.astype(jnp.float32), normals, log_u)

    conc1 = conc[:, :F]
    conc2 = conc[:, F:]
    beta_params = {
        "conc1": conc1,
        "conc2": conc2,
        "conc1_mean": jnp.mean(conc1),
        "conc2_mean": jnp.mean(conc2),
    }
    return z, {"z": z, "logits": logits, "beta": beta_params}


if __name__ == "__main__":
    # config['continuous_size'] = 32  ->  output_size = 16
    B, CONT = 2, 32
    key = jax.random.PRNGKey(0)
    k_logits, k_noise = jax.random.split(key)
    logits = jax.random.normal(k_logits, (B, CONT), dtype=jnp.float32)

    z, params = beta_forward(logits, k_noise, training=True)
    jax.block_until_ready((z, params))

    assert z.shape == (B, CONT // 2)
    assert params["z"].shape == (B, CONT // 2)
    assert params["logits"].shape == (B, CONT)
    assert params["beta"]["conc1"].shape == (B, CONT // 2)
    assert params["beta"]["conc2"].shape == (B, CONT // 2)
    assert bool(jnp.all((z > 0.0) & (z < 1.0)))
    assert bool(jnp.all((params["beta"]["conc1"] > 0.0) & (params["beta"]["conc1"] < 1.0)))
    assert bool(jnp.all((params["beta"]["conc2"] > 0.0) & (params["beta"]["conc2"] < 1.0)))
    assert bool(jnp.isfinite(params["beta"]["conc1_mean"]))
    assert bool(jnp.isfinite(params["beta"]["conc2_mean"]))
    print("KERNEL_OK")
</pallas_src>

<mosaic_0001>
module attributes {stable_mosaic.version = 11 : i64} {
  func.func @_beta_kernel(%arg0: i32, %arg1: memref<2x32xf32, #tpu.memory_space<vmem>>, %arg2: memref<6x2x32xf32, #tpu.memory_space<vmem>>, %arg3: memref<7x2x32xf32, #tpu.memory_space<vmem>>, %arg4: memref<2x16xf32, #tpu.memory_space<vmem>>, %arg5: memref<2x32xf32, #tpu.memory_space<vmem>>) attributes {dimension_semantics = [#tpu.dimension_semantics<parallel>], iteration_bounds = array<i64: 1>, scalar_prefetch = 0 : i64, scratch_operands = 0 : i64, tpu.core_type = #tpu.core_type<tc>, window_params = [{transform_indices = @transform_0, window_bounds = array<i64: 2, 32>}, {transform_indices = @transform_1, window_bounds = array<i64: 6, 2, 32>}, {transform_indices = @transform_2, window_bounds = array<i64: 7, 2, 32>}, {transform_indices = @transform_3, window_bounds = array<i64: 2, 16>}, {transform_indices = @transform_4, window_bounds = array<i64: 2, 32>}]} {
    %c0 = arith.constant 0 : index
    %c0_0 = arith.constant 0 : index
    %0 = vector.load %arg1[%c0, %c0_0] : memref<2x32xf32, #tpu.memory_space<vmem>>, vector<2x32xf32>
    %1 = arith.negf %0 : vector<2x32xf32>
    %2 = math.exp %1 : vector<2x32xf32>
    %cst = arith.constant 1.000000e+00 : f32
    %3 = vector.broadcast %cst : f32 to vector<2x32xf32>
    %4 = arith.addf %3, %2 : vector<2x32xf32>
    %5 = arith.divf %3, %4 : vector<2x32xf32>
    %c0_1 = arith.constant 0 : index
    %c0_2 = arith.constant 0 : index
    %6 = vector.load %arg5[%c0_1, %c0_2] : memref<2x32xf32, #tpu.memory_space<vmem>>, vector<2x32xf32>
    tpu.vector_store %arg5[%c0_1, %c0_2], %5 {strides = array<i32>} : memref<2x32xf32, #tpu.memory_space<vmem>>, vector<2x32xf32>,
    %cst_3 = arith.constant 9.99999974E-5 : f32
    %7 = vector.broadcast %cst_3 : f32 to vector<2x32xf32>
    %8 = arith.maximumf %5, %7 : vector<2x32xf32>
    %cst_4 = arith.constant 0.666666686 : f32
    %9 = vector.broadcast %cst_4 : f32 to vector<2x32xf32>
    %10 = arith.addf %8, %9 : vector<2x32xf32>
    %cst_5 = arith.constant 9.000000e+00 : f32
    %11 = vector.broadcast %cst_5 : f32 to vector<2x32xf32>
    %12 = arith.mulf %11, %10 : vector<2x32xf32>
    %13 = math.rsqrt %12 : vector<2x32xf32>
    %false = arith.constant false
    %14 = vector.broadcast %false : i1 to vector<2x32xi1>
    %c0_6 = arith.constant 0 : index
    %c0_7 = arith.constant 0 : index
    %c0_8 = arith.constant 0 : index
    %15 = vector.load %arg2[%c0_6, %c0_7, %c0_8] : memref<6x2x32xf32, #tpu.memory_space<vmem>>, vector<1x2x32xf32>
    %16 = vector.shape_cast %15 : vector<1x2x32xf32> to vector<2x32xf32>
    %17 = arith.mulf %13, %16 : vector<2x32xf32>
    %cst_9 = arith.constant 1.000000e+00 : f32
    %18 = vector.broadcast %cst_9 : f32 to vector<2x32xf32>
    %19 = arith.addf %18, %17 : vector<2x32xf32>
    %20 = arith.mulf %19, %19 : vector<2x32xf32>
    %21 = arith.mulf %20, %19 : vector<2x32xf32>
    %c0_10 = arith.constant 0 : index
    %c0_11 = arith.constant 0 : index
    %c0_12 = arith.constant 0 : index
    %22 = vector.load %arg3[%c0_10, %c0_11, %c0_12] : memref<7x2x32xf32, #tpu.memory_space<vmem>>, vector<1x2x32xf32>
    %23 = vector.shape_cast %22 : vector<1x2x32xf32> to vector<2x32xf32>
    %cst_13 = arith.constant 1.000000e-30 : f32
    %24 = vector.broadcast %cst_13 : f32 to vector<2x32xf32>
    %25 = arith.maximumf %21, %24 : vector<2x32xf32>
    %26 = math.log %25 : vector<2x32xf32>
    %cst_14 = arith.constant 0.000000e+00 : f32
    %27 = vector.broadcast %cst_14 : f32 to vector<2x32xf32>
    %28 = arith.cmpf ogt, %21, %27 : vector<2x32xf32>
    %cst_15 = arith.constant 5.000000e-01 : f32
    %29 = vector.broadcast %cst_15 : f32 to vector<2x32xf32>
    %30 = arith.mulf %29, %16 : vector<2x32xf32>
    %31 = arith.mulf %30, %16 : vector<2x32xf32>
    %32 = arith.addf %31, %10 : vector<2x32xf32>
    %33 = arith.mulf %10, %21 : vector<2x32xf32>
    %34 = arith.subf %32, %33 : vector<2x32xf32>
    %35 = arith.mulf %10, %26 : vector<2x32xf32>
    %36 = arith.addf %34, %35 : vector<2x32xf32>
    %37 = arith.cmpf olt, %23, %36 : vector<2x32xf32>
    %38 = arith.andi %28, %37 : vector<2x32xi1>
    %cst_16 = arith.constant dense<true> : vector<2x32xi1>
    %39 = arith.xori %14, %cst_16 : vector<2x32xi1>
    %40 = arith.andi %38, %39 : vector<2x32xi1>
    %41 = arith.mulf %10, %21 : vector<2x32xf32>
    %42 = arith.select %40, %41, %10 : vector<2x32xi1>, vector<2x32xf32>
    %43 = arith.ori %14, %38 : vector<2x32xi1>
    %c1 = arith.constant 1 : index
    %c0_17 = arith.constant 0 : index
    %c0_18 = arith.constant 0 : index
    %44 = vector.load %arg2[%c1, %c0_17, %c0_18] : memref<6x2x32xf32, #tpu.memory_space<vmem>>, vector<1x2x32xf32>
    %45 = vector.shape_cast %44 : vector<1x2x32xf32> to vector<2x32xf32>
    %46 = arith.mulf %13, %45 : vector<2x32xf32>
    %cst_19 = arith.constant 1.000000e+00 : f32
    %47 = vector.broadcast %cst_19 : f32 to vector<2x32xf32>
    %48 = arith.addf %47, %46 : vector<2x32xf32>
    %49 = arith.mulf %48, %48 : vector<2x32xf32>
    %50 = arith.mulf %49, %48 : vector<2x32xf32>
    %c1_20 = arith.constant 1 : index
    %c0_21 = arith.constant 0 : index
    %c0_22 = arith.constant 0 : index
    %51 = vector.load %arg3[%c1_20, %c0_21, %c0_22] : memref<7x2x32xf32, #tpu.memory_space<vmem>>, vector<1x2x32xf32>
    %52 = vector.shape_cast %51 : vector<1x2x32xf32> to vector<2x32xf32>
    %cst_23 = arith.constant 1.000000e-30 : f32
    %53 = vector.broadcast %cst_23 : f32 to vector<2x32xf32>
    %54 = arith.maximumf %50, %53 : vector<2x32xf32>
    %55 = math.log %54 : vector<2x32xf32>
    %cst_24 = arith.constant 0.000000e+00 : f32
    %56 = vector.broadcast %cst_24 : f32 to vector<2x32xf32>
    %57 = arith.cmpf ogt, %50, %56 : vector<2x32xf32>
    %cst_25 = arith.constant 5.000000e-01 : f32
    %58 = vector.broadcast %cst_25 : f32 to vector<2x32xf32>
    %59 = arith.mulf %58, %45 : vector<2x32xf32>
    %60 = arith.mulf %59, %45 : vector<2x32xf32>
    %61 = arith.addf %60, %10 : vector<2x32xf32>
    %62 = arith.mulf %10, %50 : vector<2x32xf32>
    %63 = arith.subf %61, %62 : vector<2x32xf32>
    %64 = arith.mulf %10, %55 : vector<2x32xf32>
    %65 = arith.addf %63, %64 : vector<2x32xf32>
    %66 = arith.cmpf olt, %52, %65 : vector<2x32xf32>
    %67 = arith.andi %57, %66 : vector<2x32xi1>
    %cst_26 = arith.constant dense<true> : vector<2x32xi1>
    %68 = arith.xori %43, %cst_26 : vector<2x32xi1>
    %69 = arith.andi %67, %68 : vector<2x32xi1>
    %70 = arith.mulf %10, %50 : vector<2x32xf32>
    %71 = arith.select %69, %70, %42 : vector<2x32xi1>, vector<2x32xf32>
    %72 = arith.ori %43, %67 : vector<2x32xi1>
    %c2 = arith.constant 2 : index
    %c0_27 = arith.constant 0 : index
    %c0_28 = arith.constant 0 : index
    %73 = vector.load %arg2[%c2, %c0_27, %c0_28] : memref<6x2x32xf32, #tpu.memory_space<vmem>>, vector<1x2x32xf32>
    %74 = vector.shape_cast %73 : vector<1x2x32xf32> to vector<2x32xf32>
    %75 = arith.mulf %13, %74 : vector<2x32xf32>
    %cst_29 = arith.constant 1.000000e+00 : f32
    %76 = vector.broadcast %cst_29 : f32 to vector<2x32xf32>
    %77 = arith.addf %76, %75 : vector<2x32xf32>
    %78 = arith.mulf %77, %77 : vector<2x32xf32>
    %79 = arith.mulf %78, %77 : vector<2x32xf32>
    %c2_30 = arith.constant 2 : index
    %c0_31 = arith.constant 0 : index
    %c0_32 = arith.constant 0 : index
    %80 = vector.load %arg3[%c2_30, %c0_31, %c0_32] : memref<7x2x32xf32, #tpu.memory_space<vmem>>, vector<1x2x32xf32>
    %81 = vector.shape_cast %80 : vector<1x2x32xf32> to vector<2x32xf32>
    %cst_33 = arith.constant 1.000000e-30 : f32
    %82 = vector.broadcast %cst_33 : f32 to vector<2x32xf32>
    %83 = arith.maximumf %79, %82 : vector<2x32xf32>
    %84 = math.log %83 : vector<2x32xf32>
    %cst_34 = arith.constant 0.000000e+00 : f32
    %85 = vector.broadcast %cst_34 : f32 to vector<2x32xf32>
    %86 = arith.cmpf ogt, %79, %85 : vector<2x32xf32>
    %cst_35 = arith.constant 5.000000e-01 : f32
    %87 = vector.broadcast %cst_35 : f32 to vector<2x32xf32>
    %88 = arith.mulf %87, %74 : vector<2x32xf32>
    %89 = arith.mulf %88, %74 : vector<2x32xf32>
    %90 = arith.addf %89, %10 : vector<2x32xf32>
    %91 = arith.mulf %10, %79 : vector<2x32xf32>
    %92 = arith.subf %90, %91 : vector<2x32xf32>
    %93 = arith.mulf %10, %84 : vector<2x32xf32>
    %94 = arith.addf %92, %93 : vector<2x32xf32>
    %95 = arith.cmpf olt, %81, %94 : vector<2x32xf32>
    %96 = arith.andi %86, %95 : vector<2x32xi1>
    %cst_36 = arith.constant dense<true> : vector<2x32xi1>
    %97 = arith.xori %72, %cst_36 : vector<2x32xi1>
    %98 = arith.andi %96, %97 : vector<2x32xi1>
    %99 = arith.mulf %10, %79 : vector<2x32xf32>
    %100 = arith.select %98, %99, %71 : vector<2x32xi1>, vector<2x32xf32>
    %101 = arith.ori %72, %96 : vector<2x32xi1>
    %c3 = arith.constant 3 : index
    %c0_37 = arith.constant 0 : index
    %c0_38 = arith.constant 0 : index
    %102 = vector.load %arg2[%c3, %c0_37, %c0_38] : memref<6x2x32xf32, #tpu.memory_space<vmem>>, vector<1x2x32xf32>
    %103 = vector.shape_cast %102 : vector<1x2x32xf32> to vector<2x32xf32>
    %104 = arith.mulf %13, %103 : vector<2x32xf32>
    %cst_39 = arith.constant 1.000000e+00 : f32
    %105 = vector.broadcast %cst_39 : f32 to vector<2x32xf32>
    %106 = arith.addf %105, %104 : vector<2x32xf32>
    %107 = arith.mulf %106, %106 : vector<2x32xf32>
    %108 = arith.mulf %107, %106 : vector<2x32xf32>
    %c3_40 = arith.constant 3 : index
    %c0_41 = arith.constant 0 : index
    %c0_42 = arith.constant 0 : index
    %109 = vector.load %arg3[%c3_40, %c0_41, %c0_42] : memref<7x2x32xf32, #tpu.memory_space<vmem>>, vector<1x2x32xf32>
    %110 = vector.shape_cast %109 : vector<1x2x32xf32> to vector<2x32xf32>
    %cst_43 = arith.constant 1.000000e-30 : f32
    %111 = vector.broadcast %cst_43 : f32 to vector<2x32xf32>
    %112 = arith.maximumf %108, %111 : vector<2x32xf32>
    %113 = math.log %112 : vector<2x32xf32>
    %cst_44 = arith.constant 0.000000e+00 : f32
    %114 = vector.broadcast %cst_44 : f32 to vector<2x32xf32>
    %115 = arith.cmpf ogt, %108, %114 : vector<2x32xf32>
    %cst_45 = arith.constant 5.000000e-01 : f32
    %116 = vector.broadcast %cst_45 : f32 to vector<2x32xf32>
    %117 = arith.mulf %116, %103 : vector<2x32xf32>
    %118 = arith.mulf %117, %103 : vector<2x32xf32>
    %119 = arith.addf %118, %10 : vector<2x32xf32>
    %120 = arith.mulf %10, %108 : vector<2x32xf32>
    %121 = arith.subf %119, %120 : vector<2x32xf32>
    %122 = arith.mulf %10, %113 : vector<2x32xf32>
    %123 = arith.addf %121, %122 : vector<2x32xf32>
    %124 = arith.cmpf olt, %110, %123 : vector<2x32xf32>
    %125 = arith.andi %115, %124 : vector<2x32xi1>
    %cst_46 = arith.constant dense<true> : vector<2x32xi1>
    %126 = arith.xori %101, %cst_46 : vector<2x32xi1>
    %127 = arith.andi %125, %126 : vector<2x32xi1>
    %128 = arith.mulf %10, %108 : vector<2x32xf32>
    %129 = arith.select %127, %128, %100 : vector<2x32xi1>, vector<2x32xf32>
    %130 = arith.ori %101, %125 : vector<2x32xi1>
    %c4 = arith.constant 4 : index
    %c0_47 = arith.constant 0 : index
    %c0_48 = arith.constant 0 : index
    %131 = vector.load %arg2[%c4, %c0_47, %c0_48] : memref<6x2x32xf32, #tpu.memory_space<vmem>>, vector<1x2x32xf32>
    %132 = vector.shape_cast %131 : vector<1x2x32xf32> to vector<2x32xf32>
    %133 = arith.mulf %13, %132 : vector<2x32xf32>
    %cst_49 = arith.constant 1.000000e+00 : f32
    %134 = vector.broadcast %cst_49 : f32 to vector<2x32xf32>
    %135 = arith.addf %134, %133 : vector<2x32xf32>
    %136 = arith.mulf %135, %135 : vector<2x32xf32>
    %137 = arith.mulf %136, %135 : vector<2x32xf32>
    %c4_50 = arith.constant 4 : index
    %c0_51 = arith.constant 0 : index
    %c0_52 = arith.constant 0 : index
    %138 = vector.load %arg3[%c4_50, %c0_51, %c0_52] : memref<7x2x32xf32, #tpu.memory_space<vmem>>, vector<1x2x32xf32>
    %139 = vector.shape_cast %138 : vector<1x2x32xf32> to vector<2x32xf32>
    %cst_53 = arith.constant 1.000000e-30 : f32
    %140 = vector.broadcast %cst_53 : f32 to vector<2x32xf32>
    %141 = arith.maximumf %137, %140 : vector<2x32xf32>
    %142 = math.log %141 : vector<2x32xf32>
    %cst_54 = arith.constant 0.000000e+00 : f32
    %143 = vector.broadcast %cst_54 : f32 to vector<2x32xf32>
    %144 = arith.cmpf ogt, %137, %143 : vector<2x32xf32>
    %cst_55 = arith.constant 5.000000e-01 : f32
    %145 = vector.broadcast %cst_55 : f32 to vector<2x32xf32>
    %146 = arith.mulf %145, %132 : vector<2x32xf32>
    %147 = arith.mulf %146, %132 : vector<2x32xf32>
    %148 = arith.addf %147, %10 : vector<2x32xf32>
    %149 = arith.mulf %10, %137 : vector<2x32xf32>
    %150 = arith.subf %148, %149 : vector<2x32xf32>
    %151 = arith.mulf %10, %142 : vector<2x32xf32>
    %152 = arith.addf %150, %151 : vector<2x32xf32>
    %153 = arith.cmpf olt, %139, %152 : vector<2x32xf32>
    %154 = arith.andi %144, %153 : vector<2x32xi1>
    %cst_56 = arith.constant dense<true> : vector<2x32xi1>
    %155 = arith.xori %130, %cst_56 : vector<2x32xi1>
    %156 = arith.andi %154, %155 : vector<2x32xi1>
    %157 = arith.mulf %10, %137 : vector<2x32xf32>
    %158 = arith.select %156, %157, %129 : vector<2x32xi1>, vector<2x32xf32>
    %159 = arith.ori %130, %154 : vector<2x32xi1>
    %c5 = arith.constant 5 : index
    %c0_57 = arith.constant 0 : index
    %c0_58 = arith.constant 0 : index
    %160 = vector.load %arg2[%c5, %c0_57, %c0_58] : memref<6x2x32xf32, #tpu.memory_space<vmem>>, vector<1x2x32xf32>
    %161 = vector.shape_cast %160 : vector<1x2x32xf32> to vector<2x32xf32>
    %162 = arith.mulf %13, %161 : vector<2x32xf32>
    %cst_59 = arith.constant 1.000000e+00 : f32
    %163 = vector.broadcast %cst_59 : f32 to vector<2x32xf32>
    %164 = arith.addf %163, %162 : vector<2x32xf32>
    %165 = arith.mulf %164, %164 : vector<2x32xf32>
    %166 = arith.mulf %165, %164 : vector<2x32xf32>
    %c5_60 = arith.constant 5 : index
    %c0_61 = arith.constant 0 : index
    %c0_62 = arith.constant 0 : index
    %167 = vector.load %arg3[%c5_60, %c0_61, %c0_62] : memref<7x2x32xf32, #tpu.memory_space<vmem>>, vector<1x2x32xf32>
    %168 = vector.shape_cast %167 : vector<1x2x32xf32> to vector<2x32xf32>
    %cst_63 = arith.constant 1.000000e-30 : f32
    %169 = vector.broadcast %cst_63 : f32 to vector<2x32xf32>
    %170 = arith.maximumf %166, %169 : vector<2x32xf32>
    %171 = math.log %170 : vector<2x32xf32>
    %cst_64 = arith.constant 0.000000e+00 : f32
    %172 = vector.broadcast %cst_64 : f32 to vector<2x32xf32>
    %173 = arith.cmpf ogt, %166, %172 : vector<2x32xf32>
    %cst_65 = arith.constant 5.000000e-01 : f32
    %174 = vector.broadcast %cst_65 : f32 to vector<2x32xf32>
    %175 = arith.mulf %174, %161 : vector<2x32xf32>
    %176 = arith.mulf %175, %161 : vector<2x32xf32>
    %177 = arith.addf %176, %10 : vector<2x32xf32>
    %178 = arith.mulf %10, %166 : vector<2x32xf32>
    %179 = arith.subf %177, %178 : vector<2x32xf32>
    %180 = arith.mulf %10, %171 : vector<2x32xf32>
    %181 = arith.addf %179, %180 : vector<2x32xf32>
    %182 = arith.cmpf olt, %168, %181 : vector<2x32xf32>
    %183 = arith.andi %173, %182 : vector<2x32xi1>
    %cst_66 = arith.constant dense<true> : vector<2x32xi1>
    %184 = arith.xori %159, %cst_66 : vector<2x32xi1>
    %185 = arith.andi %183, %184 : vector<2x32xi1>
    %186 = arith.mulf %10, %166 : vector<2x32xf32>
    %187 = arith.select %185, %186, %158 : vector<2x32xi1>, vector<2x32xf32>
    %188 = math.log %187 : vector<2x32xf32>
    %c6 = arith.constant 6 : index
    %c0_67 = arith.constant 0 : index
    %c0_68 = arith.constant 0 : index
    %189 = vector.load %arg3[%c6, %c0_67, %c0_68] : memref<7x2x32xf32, #tpu.memory_space<vmem>>, vector<1x2x32xf32>
    %190 = vector.shape_cast %189 : vector<1x2x32xf32> to vector<2x32xf32>
    %191 = arith.divf %190, %8 : vector<2x32xf32>
    %192 = arith.addf %188, %191 : vector<2x32xf32>
    %193 = vector.extract_strided_slice %192 {offsets = [0, 0], sizes = [2, 16], strides = [1, 1]} : vector<2x32xf32> to vector<2x16xf32>
    %194 = vector.extract_strided_slice %192 {offsets = [0, 16], sizes = [2, 16], strides = [1, 1]} : vector<2x32xf32> to vector<2x16xf32>
    %195 = arith.subf %193, %194 : vector<2x16xf32>
    %196 = arith.negf %195 : vector<2x16xf32>
    %197 = math.exp %196 : vector<2x16xf32>
    %cst_69 = arith.constant 1.000000e+00 : f32
    %198 = vector.broadcast %cst_69 : f32 to vector<2x16xf32>
    %199 = arith.addf %198, %197 : vector<2x16xf32>
    %200 = arith.divf %198, %199 : vector<2x16xf32>
    %cst_70 = arith.constant 9.99999997E-7 : f32
    %cst_71 = arith.constant 0.999998986 : f32
    %201 = vector.broadcast %cst_70 : f32 to vector<2x16xf32>
    %202 = arith.maximumf %201, %200 : vector<2x16xf32>
    %203 = vector.broadcast %cst_71 : f32 to vector<2x16xf32>
    %204 = arith.minimumf %203, %202 : vector<2x16xf32>
    %c0_72 = arith.constant 0 : index
    %c0_73 = arith.constant 0 : index
    %205 = vector.load %arg4[%c0_72, %c0_73] : memref<2x16xf32, #tpu.memory_space<vmem>>, vector<2x16xf32>
    tpu.vector_store %arg4[%c0_72, %c0_73], %204 {strides = array<i32>} : memref<2x16xf32, #tpu.memory_space<vmem>>, vector<2x16xf32>,
    return
  }
  func.func @transform_0(%arg0: i32) -> (i32, i32) {
    %c0_i32 = arith.constant 0 : i32
    %c0_i32_0 = arith.constant 0 : i32
    return %arg0, %c0_i32 : i32, i32
  }
  func.func @transform_1(%arg0: i32) -> (i32, i32, i32) {
    %c0_i32 = arith.constant 0 : i32
    %c0_i32_0 = arith.constant 0 : i32
    %c0_i32_1 = arith.constant 0 : i32
    return %c0_i32, %arg0, %c0_i32_0 : i32, i32, i32
  }
  func.func @transform_2(%arg0: i32) -> (i32, i32, i32) {
    %c0_i32 = arith.constant 0 : i32
    %c0_i32_0 = arith.constant 0 : i32
    %c0_i32_1 = arith.constant 0 : i32
    return %c0_i32, %arg0, %c0_i32_0 : i32, i32, i32
  }
  func.func @transform_3(%arg0: i32) -> (i32, i32) {
    %c0_i32 = arith.constant 0 : i32
    %c0_i32_0 = arith.constant 0 : i32
    return %arg0, %c0_i32 : i32, i32
  }
  func.func @transform_4(%arg0: i32) -> (i32, i32) {
    %c0_i32 = arith.constant 0 : i32
    %c0_i32_0 = arith.constant 0 : i32
    return %arg0, %c0_i32 : i32, i32
  }
}

</mosaic_0001>

<llo_original>
// kernel: beta_forward.3
$region0: #{beta_forward.3}
  #allocation0 [shape = 'u32[]', space=smem, size = 0x4, offset = 0x4, fixed_abs, tag = 'smem constant byte address 0x4 - core index']
  #allocation1 [shape = 'u32[72,128]{1,0:T(1,128)}', space=vmem, size = 0x9000, scoped, tag = 'internal scratch']
  %s0 = inlined_call_operand.vmem [shape: f32[2,32], index: 0, kind: input, shape index: {}]
  %s1 = inlined_call_operand.vmem [shape: f32[6,2,32], index: 1, kind: input, shape index: {}]
  %s2 = inlined_call_operand.vmem [shape: f32[7,2,32], index: 2, kind: input, shape index: {}]
  %s3 = inlined_call_operand.vmem [shape: f32[2,16], index: 3, kind: output, shape index: {0}]
  %s4 = inlined_call_operand.vmem [shape: f32[2,32], index: 4, kind: output, shape index: {1}]
  %5 = xla_tuple %s3, %s4
  %s6 = sld [smem:[#allocation0]]
  $region30: #{beta_forward.3} parent=0
    _
  %s8 = ssub.s32 1, %s6
  %s9 = scalar_select 0, %s8, %s6
  // Predicated region
  $region2: #{beta_forward.3} parent=0 // pred_check
    _
  $region3: #{beta_forward.3} parent=0 // pred_check_branch
    %11 = sbr.rel (0) target = $region5
  $region4: #{beta_forward.3} parent=0 // pred_region
    _
  $region5: #{beta_forward.3} parent=0 // pred_fallthru
    _
  // Predicated region
  $region6: #{beta_forward.3} parent=0 // pred_check
    _
  $region7: #{beta_forward.3} parent=0 // pred_check_branch
    %13 = sbr.rel (0) target = $region9
  $region8: #{beta_forward.3} parent=0 // pred_region
    _
  $region9: #{beta_forward.3} parent=0 // pred_fallthru
    _
  // Predicated region
  $region10: #{beta_forward.3} parent=0 // pred_check
    _
  $region11: #{beta_forward.3} parent=0 // pred_check_branch
    %15 = sbr.rel (0) target = $region13
  $region12: #{beta_forward.3} parent=0 // pred_region
    _
  $region13: #{beta_forward.3} parent=0 // pred_fallthru
    _
  %v16 = vld [vmem:[%s0] sm:$0x3]
  %v17 = vxor.u32 %v16, 2147483648
  %v18 = vmul.f32 %v17, 1.442695
  %v19 = vpow.pop %v18
  %v20 = vadd.f32 %v19, 1.0
  %v21 = vrcp.pop %v20
  %v22 = vmul.f32 %v20, %v21
  %v23 = vsub.f32 1.0, %v22
  %v24 = vmul.f32 %v21, %v23
  %v25 = vadd.f32 %v21, %v24
  %vm26 = vweird.f32 %v20
  %vm27 = vweird.f32 %v21
  %vm28 = vmor %vm26, %vm27
  %v29 = vsel %vm28, %v21, %v25
  %v30 = vand.u32 2147483647, %v20
  %vm31 = vcmp.eq.f32.partialorder %v30, 8.507059e+37
  %v32 = vand.u32 %v20, 2147483648
  %v33 = vor.u32 1.1754944e-38, %v32
  %v34 = vsel %vm31, %v33, %v29
  %v35 = vmul.f32 1.0, %v34
  %vm36 = vcmask 254976
  %37 = vst.msk [vmem:[%s4] sm:$0x3] %vm36, %v35
  %v38 = vmax.f32 %v35, 0.0001
  %v39 = vadd.f32 %v38, 0.6666667
  %v40 = vmul.f32 %v39, 9.0
  %v41 = vrsqrt.pop %v40
  %v42 = vmul.f32 %v41, %v40
  %v43 = vmul.f32 %v42, %v41
  %v44 = vmul.f32 0.5, %v43
  %v45 = vsub.f32 1.5, %v44
  %v46 = vmul.f32 %v41, %v45
  %vm47 = vweird.f32 %v40
  %vm48 = vweird.f32 %v41
  %vm49 = vmor %vm47, %vm48
  %v50 = vsel %vm49, %v41, %v46
  %v51 = vld [vmem:[%s1] sm:$0x3]
  %v52 = vmul.f32 %v50, %v51
  %v53 = vadd.f32 %v52, 1.0
  %v54 = vmul.f32 %v53, %v53
  %v55 = vmul.f32 %v54, %v53
  %v56 = vld [vmem:[%s2] sm:$0x3]
  %v57 = vmax.f32 %v55, 1e-30
  %v58 = vlog2.pop %v57
  %v59 = vmul.f32 %v58, 0.6931472
  %vm60 = vcmp.gt.f32.partialorder %v55, 0.0
  %v61 = vmul.f32 %v51, 0.5
  %v62 = vmul.f32 %v61, %v51
  %v63 = vadd.f32 %v62, %v39
  %v64 = vmul.f32 %v39, %v55
  %v65 = vsub.f32 %v63, %v64
  %v66 = vmul.f32 %v39, %v59
  %v67 = vadd.f32 %v65, %v66
  %vm68 = vcmp.lt.f32.partialorder %v56, %v67
  %vm69 = vmand %vm60, %vm68
  %v70 = vsel %vm69, %v64, %v39
  %s71 = scalar_lea.vmem %s1, 2
  %v72 = vld [vmem:[%s71] sm:$0x3]
  %v73 = vmul.f32 %v50, %v72
  %v74 = vadd.f32 %v73, 1.0
  %v75 = vmul.f32 %v74, %v74
  %v76 = vmul.f32 %v75, %v74
  %s77 = scalar_lea.vmem %s2, 2
  %v78 = vld [vmem:[%s77] sm:$0x3]
  %v79 = vmax.f32 %v76, 1e-30
  %v80 = vlog2.pop %v79
  %v81 = vmul.f32 %v80, 0.6931472
  %vm82 = vcmp.gt.f32.partialorder %v76, 0.0
  %v83 = vmul.f32 %v72, 0.5
  %v84 = vmul.f32 %v83, %v72
  %v85 = vadd.f32 %v84, %v39
  %v86 = vmul.f32 %v39, %v76
  %v87 = vsub.f32 %v85, %v86
  %v88 = vmul.f32 %v39, %v81
  %v89 = vadd.f32 %v87, %v88
  %vm90 = vcmp.lt.f32.partialorder %v78, %v89
  %vm91 = vmand %vm82, %vm90
  %vm92 = vmxor %vm69, 1
  %vm93 = vmand %vm91, %vm92
  %v94 = vsel %vm93, %v86, %v70
  %vm95 = vmor %vm69, %vm91
  %s96 = scalar_lea.vmem %s1, 4
  %v97 = vld [vmem:[%s96] sm:$0x3]
  %v98 = vmul.f32 %v50, %v97
  %v99 = vadd.f32 %v98, 1.0
  %v100 = vmul.f32 %v99, %v99
  %v101 = vmul.f32 %v100, %v99
  %s102 = scalar_lea.vmem %s2, 4
  %v103 = vld [vmem:[%s102] sm:$0x3]
  %v104 = vmax.f32 %v101, 1e-30
  %v105 = vlog2.pop %v104
  %v106 = vmul.f32 %v105, 0.6931472
  %vm107 = vcmp.gt.f32.partialorder %v101, 0.0
  %v108 = vmul.f32 %v97, 0.5
  %v109 = vmul.f32 %v108, %v97
  %v110 = vadd.f32 %v109, %v39
  %v111 = vmul.f32 %v39, %v101
  %v112 = vsub.f32 %v110, %v111
  %v113 = vmul.f32 %v39, %v106
  %v114 = vadd.f32 %v112, %v113
  %vm115 = vcmp.lt.f32.partialorder %v103, %v114
  %vm116 = vmand %vm107, %vm115
  %vm117 = vmxor %vm95, 1
  %vm118 = vmand %vm116, %vm117
  %v119 = vsel %vm118, %v111, %v94
  %vm120 = vmor %vm95, %vm116
  %s121 = scalar_lea.vmem %s1, 6
  %v122 = vld [vmem:[%s121] sm:$0x3]
  %v123 = vmul.f32 %v50, %v122
  %v124 = vadd.f32 %v123, 1.0
  %v125 = vmul.f32 %v124, %v124
  %v126 = vmul.f32 %v125, %v124
  %s127 = scalar_lea.vmem %s2, 6
  %v128 = vld [vmem:[%s127] sm:$0x3]
  %v129 = vmax.f32 %v126, 1e-30
  %v130 = vlog2.pop %v129
  %v131 = vmul.f32 %v130, 0.6931472
  %vm132 = vcmp.gt.f32.partialorder %v126, 0.0
  %v133 = vmul.f32 %v122, 0.5
  %v134 = vmul.f32 %v133, %v122
  %v135 = vadd.f32 %v134, %v39
  %v136 = vmul.f32 %v39, %v126
  %v137 = vsub.f32 %v135, %v136
  %v138 = vmul.f32 %v39, %v131
  %v139 = vadd.f32 %v137, %v138
  %vm140 = vcmp.lt.f32.partialorder %v128, %v139
  %vm141 = vmand %vm132, %vm140
  %vm142 = vmxor %vm120, 1
  %vm143 = vmand %vm141, %vm142
  %v144 = vsel %vm143, %v136, %v119
  %vm145 = vmor %vm120, %vm141
  %s146 = scalar_lea.vmem %s1, 8
  %v147 = vld [vmem:[%s146] sm:$0x3]
  %v148 = vmul.f32 %v50, %v147
  %v149 = vadd.f32 %v148, 1.0
  %v150 = vmul.f32 %v149, %v149
  %v151 = vmul.f32 %v150, %v149
  %s152 = scalar_lea.vmem %s2, 8
  %v153 = vld [vmem:[%s152] sm:$0x3]
  %v154 = vmax.f32 %v151, 1e-30
  %v155 = vlog2.pop %v154
  %v156 = vmul.f32 %v155, 0.6931472
  %vm157 = vcmp.gt.f32.partialorder %v151, 0.0
  %v158 = vmul.f32 %v147, 0.5
  %v159 = vmul.f32 %v158, %v147
  %v160 = vadd.f32 %v159, %v39
  %v161 = vmul.f32 %v39, %v151
  %v162 = vsub.f32 %v160, %v161
  %v163 = vmul.f32 %v39, %v156
  %v164 = vadd.f32 %v162, %v163
  %vm165 = vcmp.lt.f32.partialorder %v153, %v164
  %vm166 = vmand %vm157, %vm165
  %vm167 = vmxor %vm145, 1
  %vm168 = vmand %vm166, %vm167
  %v169 = vsel %vm168, %v161, %v144
  %vm170 = vmor %vm145, %vm166
  %s171 = scalar_lea.vmem %s1, 10
  %v172 = vld [vmem:[%s171] sm:$0x3]
  %v173 = vmul.f32 %v50, %v172
  %v174 = vadd.f32 %v173, 1.0
  %v175 = vmul.f32 %v174, %v174
  %v176 = vmul.f32 %v175, %v174
  %s177 = scalar_lea.vmem %s2, 10
  %v178 = vld [vmem:[%s177] sm:$0x3]
  %v179 = vmax.f32 %v176, 1e-30
  %v180 = vlog2.pop %v179
  %v181 = vmul.f32 %v180, 0.6931472
  %vm182 = vcmp.gt.f32.partialorder %v176, 0.0
  %v183 = vmul.f32 %v172, 0.5
  %v184 = vmul.f32 %v183, %v172
  %v185 = vadd.f32 %v184, %v39
  %v186 = vmul.f32 %v39, %v176
  %v187 = vsub.f32 %v185, %v186
  %v188 = vmul.f32 %v39, %v181
  %v189 = vadd.f32 %v187, %v188
  %vm190 = vcmp.lt.f32.partialorder %v178, %v189
  %vm191 = vmand %vm182, %vm190
  %vm192 = vmxor %vm170, 1
  %vm193 = vmand %vm191, %vm192
  %v194 = vsel %vm193, %v186, %v169
  %v195 = vlog2.pop %v194
  %v196 = vmul.f32 %v195, 0.6931472
  %s197 = scalar_lea.vmem %s2, 12
  %v198 = vld [vmem:[%s197] sm:$0x3]
  %v199 = vrcp.pop %v38
  %v200 = vmul.f32 %v38, %v199
  %v201 = vsub.f32 1.0, %v200
  %v202 = vmul.f32 %v199, %v201
  %v203 = vadd.f32 %v199, %v202
  %vm204 = vweird.f32 %v38
  %vm205 = vweird.f32 %v199
  %vm206 = vmor %vm204, %vm205
  %v207 = vsel %vm206, %v199, %v203
  %v208 = vand.u32 2147483647, %v38
  %vm209 = vcmp.eq.f32.partialorder %v208, 8.507059e+37
  %v210 = vand.u32 %v38, 2147483648
  %v211 = vor.u32 1.1754944e-38, %v210
  %v212 = vsel %vm209, %v211, %v207
  %v213 = vmul.f32 %v198, %v212
  %v214 = vadd.f32 %v196, %v213
  %216 = vrot.lane.b32.xlu0 %v214, 112
  %v217 = vpop.permute.xlu0 %216
  %v219 = vsub.f32 %v214, %v217
  %v220 = vxor.u32 %v219, 2147483648
  %v221 = vmul.f32 %v220, 1.442695
  %v222 = vpow.pop %v221
  %v223 = vadd.f32 %v222, 1.0
  %v224 = vrcp.pop %v223
  %v225 = vmul.f32 %v223, %v224
  %v226 = vsub.f32 1.0, %v225
  %v227 = vmul.f32 %v224, %v226
  %v228 = vadd.f32 %v224, %v227
  %vm229 = vweird.f32 %v223
  %vm230 = vweird.f32 %v224
  %vm231 = vmor %vm229, %vm230
  %v232 = vsel %vm231, %v224, %v228
  %v233 = vand.u32 2147483647, %v223
  %vm234 = vcmp.eq.f32.partialorder %v233, 8.507059e+37
  %v235 = vand.u32 %v223, 2147483648
  %v236 = vor.u32 1.1754944e-38, %v235
  %v237 = vsel %vm234, %v236, %v232
  %v238 = vmul.f32 1.0, %v237
  %v239 = vmax.f32 %v238, 1e-06
  %v240 = vmin.f32 %v239, 0.999999
  %vm241 = vcmask 123904
  %242 = vst.msk [vmem:[%s3] sm:$0x3] %vm241, %v240
  // Predicated region
  $region14: #{beta_forward.3} parent=0 // pred_check
    _
  $region15: #{beta_forward.3} parent=0 // pred_check_branch
    %244 = sbr.rel (0) target = $region17
  $region16: #{beta_forward.3} parent=0 // pred_region
    _
  $region17: #{beta_forward.3} parent=0 // pred_fallthru
    _
  // Predicated region
  $region18: #{beta_forward.3} parent=0 // pred_check
    _
  $region19: #{beta_forward.3} parent=0 // pred_check_branch
    %246 = sbr.rel (0) target = $region21
  $region20: #{beta_forward.3} parent=0 // pred_region
    _
  $region21: #{beta_forward.3} parent=0 // pred_fallthru
    _
  // Predicated region
  $region22: #{beta_forward.3} parent=0 // pred_check
    _
  $region23: #{beta_forward.3} parent=0 // pred_check_branch
    %248 = sbr.rel (0) target = $region25
  $region24: #{beta_forward.3} parent=0 // pred_region
    _
  $region25: #{beta_forward.3} parent=0 // pred_fallthru
    _
  // Predicated region
  $region26: #{beta_forward.3} parent=0 // pred_check
    _
  $region27: #{beta_forward.3} parent=0 // pred_check_branch
    %250 = sbr.rel (0) target = $region29
  $region28: #{beta_forward.3} parent=0 // pred_region
    _
  $region29: #{beta_forward.3} parent=0 // pred_fallthru
    _

</llo_original>
